<compile_context>
chip_gen: v7x
topology: tpu7x:2x2x1
jax: 0.10.0
libtpu: 0.0.40
codegen_flags: <defaults>
</compile_context>

<pallas_src>
import jax
import jax.numpy as jnp
from jax.experimental import pallas as pl
from jax.experimental.pallas import tpu as pltpu


def _cat_kernel_shared_suffix(prefix_ref, ctx_ref, ctxd_ref, suffix_ref,
                              pos_ref, neg_ref):
    """One grid step handles TC classes.  Suffix is shared between pos and neg
    (neg_prompt_wcls=True path), so it is read from HBM exactly once."""
    tc, dim = prefix_ref.shape
    nctx_d = ctx_ref.shape[1]
    prefix = prefix_ref[...]
    suffix = suffix_ref[...]
    # Broadcast the shared contexts across the class block once (sublane
    # broadcast, hoisted out of any per-class work).
    ctx_b = jnp.broadcast_to(ctx_ref[...], (tc, nctx_d))
    ctxd_b = jnp.broadcast_to(ctxd_ref[...], (tc, nctx_d))
    # Static, lane-aligned segment stores (unmasked vst when dim % 128 == 0).
    pos_ref[:, 0:dim] = prefix
    pos_ref[:, dim:dim + nctx_d] = ctx_b
    pos_ref[:, dim + nctx_d:] = suffix
    neg_ref[:, 0:dim] = prefix
    neg_ref[:, dim:dim + nctx_d] = ctxd_b
    neg_ref[:, dim + nctx_d:] = suffix


def _cat_kernel_split_suffix(prefix_ref, ctx_ref, ctxd_ref, suffix_ref,
                             suffix_neg_ref, pos_ref, neg_ref):
    """neg_prompt_wcls=False path: negative prompt uses the no-class suffix."""
    tc, dim = prefix_ref.shape
    nctx_d = ctx_ref.shape[1]
    prefix = prefix_ref[...]
    ctx_b = jnp.broadcast_to(ctx_ref[...], (tc, nctx_d))
    ctxd_b = jnp.broadcast_to(ctxd_ref[...], (tc, nctx_d))
    pos_ref[:, 0:dim] = prefix
    pos_ref[:, dim:dim + nctx_d] = ctx_b
    pos_ref[:, dim + nctx_d:] = suffix_ref[...]
    neg_ref[:, 0:dim] = prefix
    neg_ref[:, dim:dim + nctx_d] = ctxd_b
    neg_ref[:, dim + nctx_d:] = suffix_neg_ref[...]


def build_prompts_pallas(ctx, ctx_double, token_prefix, token_suffix,
                         token_suffix_nocls=None, neg_prompt_wcls=True,
                         class_block=None, vmem_budget_bytes=24 * 1024 * 1024):
    """Pallas implementation of TextPromptLearner.forward (class_token_position='end').

    ctx, ctx_double    : (n_ctx, D)   generic (shared) learned contexts
    token_prefix       : (n_cls, 1, D)
    token_suffix       : (n_cls, S_suf, D)
    token_suffix_nocls : (n_cls, S_suf, D)  (only used when neg_prompt_wcls=False)
    Returns (prompts, prompts_neg), each (n_cls, 1 + n_ctx + S_suf, D).
    """
    n_cls = token_prefix.shape[0]
    n_ctx, dim = ctx.shape
    s_suf = token_suffix.shape[1]
    seq = 1 + n_ctx + s_suf
    dtype = ctx.dtype
    itemsize = jnp.dtype(dtype).itemsize

    n_suffix_inputs = 1 if neg_prompt_wcls else 2

    # --- flatten (seq, dim) into the lane axis (row-major, so reshape is free)
    # If dim is not a multiple of 128 this is still correct, just loses the
    # lane-alignment of the segment stores.
    prefix2d = token_prefix.reshape(n_cls, dim)
    suffix2d = token_suffix.reshape(n_cls, s_suf * dim)
    ctx2d = ctx.reshape(1, n_ctx * dim)
    ctxd2d = ctx_double.reshape(1, n_ctx * dim)

    # --- pick the class-block size from a VMEM budget (double-buffered tiles).
    per_class = (2 * seq + 1 + n_suffix_inputs * s_suf) * dim * itemsize * 2
    if class_block is None:
        class_block = max(1, vmem_budget_bytes // max(per_class, 1))
    tc = int(max(1, min(class_block, n_cls)))
    if tc < n_cls:
        tc = max(8, (tc // 8) * 8)   # keep class blocks sublane-aligned
        tc = min(tc, n_cls)

    grid = (pl.cdiv(n_cls, tc),)

    in_specs = [
        pl.BlockSpec((tc, dim), lambda i: (i, 0)),              # token_prefix
        pl.BlockSpec((1, n_ctx * dim), lambda i: (0, 0)),       # ctx (shared, resident)
        pl.BlockSpec((1, n_ctx * dim), lambda i: (0, 0)),       # ctx_double (shared)
        pl.BlockSpec((tc, s_suf * dim), lambda i: (i, 0)),      # token_suffix
    ]
    inputs = [prefix2d, ctx2d, ctxd2d, suffix2d]

    if neg_prompt_wcls:
        kernel = _cat_kernel_shared_suffix
    else:
        kernel = _cat_kernel_split_suffix
        in_specs.append(pl.BlockSpec((tc, s_suf * dim), lambda i: (i, 0)))
        inputs.append(token_suffix_nocls.reshape(n_cls, s_suf * dim))

    out_shapes = (
        jax.ShapeDtypeStruct((n_cls, seq * dim), dtype),
        jax.ShapeDtypeStruct((n_cls, seq * dim), dtype),
    )
    out_specs = [
        pl.BlockSpec((tc, seq * dim), lambda i: (i, 0)),
        pl.BlockSpec((tc, seq * dim), lambda i: (i, 0)),
    ]

    # Raise the scoped VMEM limit explicitly (v5e default is 16 MiB); clamp so it
    # also fits v7x's 64 MiB physical VMEM with headroom.
    ctx_bytes = 2 * n_ctx * dim * itemsize * 2
    vmem_limit = int(min(max(per_class * tc + ctx_bytes + (4 << 20), 16 << 20),
                         48 << 20))

    grid_spec = pltpu.PrefetchScalarGridSpec(
        num_scalar_prefetch=0,
        grid=grid,
        in_specs=in_specs,
        out_specs=out_specs,
    )

    prompts_flat, prompts_neg_flat = pl.pallas_call(
        kernel,
        out_shape=out_shapes,
        grid_spec=grid_spec,
        compiler_params=pltpu.CompilerParams(
            dimension_semantics=("parallel",),
            vmem_limit_bytes=vmem_limit),
    )(*inputs)

    # Row-major reshape back to (n_cls, seq, dim) — a free bitcast.
    prompts = prompts_flat.reshape(n_cls, seq, dim)
    prompts_neg = prompts_neg_flat.reshape(n_cls, seq, dim)
    return prompts, prompts_neg


class TextPromptLearner:
    """JAX/Pallas port of the PyTorch TextPromptLearner (generic-context, CSC=False,
    class_token_position='end'). Frozen CLIP-token-embedding buffers are synthesized."""

    def __init__(self, n_cls, n_ctx, ctx_dim, total_seq, key, dtype=jnp.float32):
        # TODO(synk): the real module builds token_prefix/suffix via the CLIP tokenizer
        # + token_embedding; here those frozen buffers are synthesized with randoms.
        k_ctx, k_ctxd, k_emb, k_emb_nocls = jax.random.split(key, 4)
        self.n_cls = n_cls
        self.n_ctx = n_ctx
        self.ctx = (0.02 * jax.random.normal(k_ctx, (n_ctx, ctx_dim))).astype(dtype)
        self.ctx_double = (0.02 * jax.random.normal(k_ctxd, (n_ctx, ctx_dim))).astype(dtype)
        self.temperature = jnp.asarray(3.0, dtype=dtype)
        self.spatial_T = jnp.asarray(3.0, dtype=dtype)
        self.ranking_scale = jnp.asarray(4.0, dtype=dtype)
        embedding = jax.random.normal(k_emb, (n_cls, total_seq, ctx_dim)).astype(dtype)
        embedding_nocls = jax.random.normal(
            k_emb_nocls, (n_cls, total_seq, ctx_dim)).astype(dtype)
        self.token_prefix = embedding[:, :1, :]
        self.token_suffix = embedding[:, 1 + n_ctx:, :]
        self.token_suffix_nocls = embedding_nocls[:, 1 + n_ctx:, :]
        self.class_token_position = "end"

    def forward(self, neg_prompt_wcls=True):
        if self.class_token_position != "end":
            raise ValueError
        prompts, prompts_neg = build_prompts_pallas(
            self.ctx, self.ctx_double, self.token_prefix, self.token_suffix,
            self.token_suffix_nocls, neg_prompt_wcls=neg_prompt_wcls)
        return (prompts, prompts_neg, self.temperature, self.spatial_T,
                self.ranking_scale)


def _reference_forward(learner, neg_prompt_wcls=True):
    ctx = jnp.broadcast_to(learner.ctx[None], (learner.n_cls,) + learner.ctx.shape)
    ctxd = jnp.broadcast_to(learner.ctx_double[None],
                            (learner.n_cls,) + learner.ctx_double.shape)
    prompts = jnp.concatenate(
        [learner.token_prefix, ctx, learner.token_suffix], axis=1)
    suf_neg = learner.token_suffix if neg_prompt_wcls else learner.token_suffix_nocls
    prompts_neg = jnp.concatenate([learner.token_prefix, ctxd, suf_neg], axis=1)
    return prompts, prompts_neg


if __name__ == "__main__":
    key = jax.random.PRNGKey(0)
    # small shapes: 8 classes, 8 context tokens, 128-dim embedding (lane-dense),
    # 16-token total sequence -> suffix length 7.
    n_cls, n_ctx, ctx_dim, total_seq = 8, 8, 128, 16

    learner = TextPromptLearner(n_cls, n_ctx, ctx_dim, total_seq, key)

    prompts, prompts_neg, temp, spatial_T, rank_scale = learner.forward(
        neg_prompt_wcls=True)
    jax.block_until_ready((prompts, prompts_neg, temp, spatial_T, rank_scale))

    ref_p, ref_n = _reference_forward(learner, neg_prompt_wcls=True)
    assert prompts.shape == (n_cls, total_seq, ctx_dim)
    assert prompts_neg.shape == (n_cls, total_seq, ctx_dim)
    assert jnp.allclose(prompts, ref_p)
    assert jnp.allclose(prompts_neg, ref_n)

    # also exercise the no-class-suffix negative branch
    _, prompts_neg_nocls, *_ = learner.forward(neg_prompt_wcls=False)
    jax.block_until_ready(prompts_neg_nocls)
    _, ref_n2 = _reference_forward(learner, neg_prompt_wcls=False)
    assert jnp.allclose(prompts_neg_nocls, ref_n2)

    print("KERNEL_OK")
</pallas_src>

<mosaic_0001>
module attributes {stable_mosaic.version = 11 : i64} {
  func.func @_cat_kernel_shared_suffix(%arg0: i32, %arg1: memref<8x128xf32, #tpu.memory_space<vmem>>, %arg2: memref<1x1024xf32, #tpu.memory_space<vmem>>, %arg3: memref<1x1024xf32, #tpu.memory_space<vmem>>, %arg4: memref<8x896xf32, #tpu.memory_space<vmem>>, %arg5: memref<8x2048xf32, #tpu.memory_space<vmem>>, %arg6: memref<8x2048xf32, #tpu.memory_space<vmem>>) attributes {dimension_semantics = [#tpu.dimension_semantics<parallel>], iteration_bounds = array<i64: 1>, scalar_prefetch = 0 : i64, scratch_operands = 0 : i64, tpu.core_type = #tpu.core_type<tc>, window_params = [{transform_indices = @transform_0, window_bounds = array<i64: 8, 128>}, {pipeline_mode = #tpu.pipeline_mode<synchronous>, transform_indices = @transform_1, window_bounds = array<i64: 1, 1024>}, {pipeline_mode = #tpu.pipeline_mode<synchronous>, transform_indices = @transform_2, window_bounds = array<i64: 1, 1024>}, {transform_indices = @transform_3, window_bounds = array<i64: 8, 896>}, {transform_indices = @transform_4, window_bounds = array<i64: 8, 2048>}, {transform_indices = @transform_5, window_bounds = array<i64: 8, 2048>}]} {
    %c0 = arith.constant 0 : index
    %c0_0 = arith.constant 0 : index
    %0 = vector.load %arg1[%c0, %c0_0] : memref<8x128xf32, #tpu.memory_space<vmem>>, vector<8x128xf32>
    %c0_1 = arith.constant 0 : index
    %c0_2 = arith.constant 0 : index
    %1 = vector.load %arg4[%c0_1, %c0_2] : memref<8x896xf32, #tpu.memory_space<vmem>>, vector<8x896xf32>
    %c0_3 = arith.constant 0 : index
    %c0_4 = arith.constant 0 : index
    %2 = vector.load %arg2[%c0_3, %c0_4] : memref<1x1024xf32, #tpu.memory_space<vmem>>, vector<1x1024xf32>
    %3 = vector.shape_cast %2 : vector<1x1024xf32> to vector<1x1024xf32>
    %4 = vector.broadcast %3 : vector<1x1024xf32> to vector<8x1024xf32>
    %c0_5 = arith.constant 0 : index
    %c0_6 = arith.constant 0 : index
    %5 = vector.load %arg3[%c0_5, %c0_6] : memref<1x1024xf32, #tpu.memory_space<vmem>>, vector<1x1024xf32>
    %6 = vector.shape_cast %5 : vector<1x1024xf32> to vector<1x1024xf32>
    %7 = vector.broadcast %6 : vector<1x1024xf32> to vector<8x1024xf32>
    %c0_7 = arith.constant 0 : index
    %c0_8 = arith.constant 0 : index
    %8 = vector.load %arg5[%c0_7, %c0_8] : memref<8x2048xf32, #tpu.memory_space<vmem>>, vector<8x128xf32>
    tpu.vector_store %arg5[%c0_7, %c0_8], %0 {strides = array<i32>} : memref<8x2048xf32, #tpu.memory_space<vmem>>, vector<8x128xf32>,
    %c0_9 = arith.constant 0 : index
    %c128 = arith.constant 128 : index
    %9 = vector.load %arg5[%c0_9, %c128] : memref<8x2048xf32, #tpu.memory_space<vmem>>, vector<8x1024xf32>
    tpu.vector_store %arg5[%c0_9, %c128], %4 {strides = array<i32>} : memref<8x2048xf32, #tpu.memory_space<vmem>>, vector<8x1024xf32>,
    %c0_10 = arith.constant 0 : index
    %c1152 = arith.constant 1152 : index
    %10 = vector.load %arg5[%c0_10, %c1152] : memref<8x2048xf32, #tpu.memory_space<vmem>>, vector<8x896xf32>
    tpu.vector_store %arg5[%c0_10, %c1152], %1 {strides = array<i32>} : memref<8x2048xf32, #tpu.memory_space<vmem>>, vector<8x896xf32>,
    %c0_11 = arith.constant 0 : index
    %c0_12 = arith.constant 0 : index
    %11 = vector.load %arg6[%c0_11, %c0_12] : memref<8x2048xf32, #tpu.memory_space<vmem>>, vector<8x128xf32>
    tpu.vector_store %arg6[%c0_11, %c0_12], %0 {strides = array<i32>} : memref<8x2048xf32, #tpu.memory_space<vmem>>, vector<8x128xf32>,
    %c0_13 = arith.constant 0 : index
    %c128_14 = arith.constant 128 : index
    %12 = vector.load %arg6[%c0_13, %c128_14] : memref<8x2048xf32, #tpu.memory_space<vmem>>, vector<8x1024xf32>
    tpu.vector_store %arg6[%c0_13, %c128_14], %7 {strides = array<i32>} : memref<8x2048xf32, #tpu.memory_space<vmem>>, vector<8x1024xf32>,
    %c0_15 = arith.constant 0 : index
    %c1152_16 = arith.constant 1152 : index
    %13 = vector.load %arg6[%c0_15, %c1152_16] : memref<8x2048xf32, #tpu.memory_space<vmem>>, vector<8x896xf32>
    tpu.vector_store %arg6[%c0_15, %c1152_16], %1 {strides = array<i32>} : memref<8x2048xf32, #tpu.memory_space<vmem>>, vector<8x896xf32>,
    return
  }
  func.func @transform_0(%arg0: i32) -> (i32, i32) {
    %c0_i32 = arith.constant 0 : i32
    %c0_i32_0 = arith.constant 0 : i32
    return %arg0, %c0_i32 : i32, i32
  }
  func.func @transform_1(%arg0: i32) -> (i32, i32) {
    %c0_i32 = arith.constant 0 : i32
    %c0_i32_0 = arith.constant 0 : i32
    %c0_i32_1 = arith.constant 0 : i32
    return %c0_i32, %c0_i32_0 : i32, i32
  }
  func.func @transform_2(%arg0: i32) -> (i32, i32) {
    %c0_i32 = arith.constant 0 : i32
    %c0_i32_0 = arith.constant 0 : i32
    %c0_i32_1 = arith.constant 0 : i32
    return %c0_i32, %c0_i32_0 : i32, i32
  }
  func.func @transform_3(%arg0: i32) -> (i32, i32) {
    %c0_i32 = arith.constant 0 : i32
    %c0_i32_0 = arith.constant 0 : i32
    return %arg0, %c0_i32 : i32, i32
  }
  func.func @transform_4(%arg0: i32) -> (i32, i32) {
    %c0_i32 = arith.constant 0 : i32
    %c0_i32_0 = arith.constant 0 : i32
    return %arg0, %c0_i32 : i32, i32
  }
  func.func @transform_5(%arg0: i32) -> (i32, i32) {
    %c0_i32 = arith.constant 0 : i32
    %c0_i32_0 = arith.constant 0 : i32
    return %arg0, %c0_i32 : i32, i32
  }
}

</mosaic_0001>

<llo_original>
// kernel: tpu_custom_call.1
$region0: #{tpu_custom_call.1}
  #allocation0 [shape = 'u32[]', space=smem, size = 0x4, offset = 0x4, fixed_abs, tag = 'smem constant byte address 0x4 - core index']
  #allocation1 [shape = 'u32[144,128]{1,0:T(1,128)}', space=vmem, size = 0x12000, scoped, tag = 'internal scratch']
  %s0 = inlined_call_operand.hbm [shape: f32[8,128], index: 0, kind: input, shape index: {}]
  %s1 = inlined_call_operand.hbm [shape: f32[1,1024], index: 1, kind: input, shape index: {}]
  %s2 = inlined_call_operand.hbm [shape: f32[1,1024], index: 2, kind: input, shape index: {}]
  %s3 = inlined_call_operand.hbm [shape: f32[8,896], index: 3, kind: input, shape index: {}]
  %s4 = inlined_call_operand.hbm [shape: f32[8,2048], index: 4, kind: output, shape index: {0}]
  %s5 = inlined_call_operand.hbm [shape: f32[8,2048], index: 5, kind: output, shape index: {1}]
  %6 = xla_tuple %s4, %s5
  %s7 = sld [smem:[#allocation0]]
  $region50: #{tpu_custom_call.1} parent=0
    _
  %s9 = ssub.s32 1, %s7
  %s10 = scalar_select 0, %s9, %s7
  $region1: #{tpu_custom_call.1} parent=0
    #allocation2 [shape = 'u8[4096]{0}', space=vmem, size = 0x1000, scoped, tag = 'input window, operand 0, single buffered']
    #allocation3 [shape = 's32[1]{0}', space=sflag, size = 0x4, scoped, tag = 'scoped memory for tpu_custom_call.1']
    #allocation4 [shape = 's32[1]{0}', space=sflag, size = 0x4, scoped, tag = 'scoped memory for tpu_custom_call.1']
    #allocation5 [shape = 'u8[4096]{0}', space=vmem, size = 0x1000, scoped, tag = 'input window, operand 1, single buffered']
    #allocation6 [shape = 's32[1]{0}', space=sflag, size = 0x4, scoped, tag = 'scoped memory for tpu_custom_call.1']
    #allocation7 [shape = 'u8[4096]{0}', space=vmem, size = 0x1000, scoped, tag = 'input window, operand 2, single buffered']
    #allocation8 [shape = 'u8[28672]{0}', space=vmem, size = 0x7000, scoped, tag = 'input window, operand 3, single buffered']
    #allocation9 [shape = 's32[1]{0}', space=sflag, size = 0x4, scoped, tag = 'scoped memory for tpu_custom_call.1']
    #allocation10 [shape = 'u8[65536]{0}', space=vmem, size = 0x10000, scoped, tag = 'output window, operand 0, single buffered']
    #allocation11 [shape = 'u8[65536]{0}', space=vmem, size = 0x10000, scoped, tag = 'output window, operand 1, single buffered']
    #allocation12 [shape = 's32[1]{0}', space=sflag, size = 0x4, scoped, tag = 'scoped memory for tpu_custom_call.1']
    %11 = vsyncpa [#allocation3], 0
    %12 = vsyncpa [#allocation6], 0
    %13 = vsyncpa [#allocation9], 0
    %14 = vsyncpa [#allocation4], 0
    %15 = vsyncpa [#allocation12], 0
    // Predicated region
    $region2: #{tpu_custom_call.1} parent=1 // pred_check
      _
    $region3: #{tpu_custom_call.1} parent=1 // pred_check_branch
      %17 = sbr.rel (0) target = $region5
    $region4: #{tpu_custom_call.1} parent=1 // pred_region
      %s19 = ssub.s32 128, 128
      %20 = vsyncadd [#allocation3], %s19
      %s22 = sshll.u32 [#allocation2], 4
      %s23 = int_to_ptr.vmem [resolvable:$true] %s22
      %25 = dma.hbm_to_vmem [thread:$0]  %s0, 128, %s23, [#allocation3]
    $region5: #{tpu_custom_call.1} parent=1 // pred_fallthru
      _
    // Predicated region
    $region6: #{tpu_custom_call.1} parent=1 // pred_check
      _
    $region7: #{tpu_custom_call.1} parent=1 // pred_check_branch
      %27 = sbr.rel (0) target = $region9
    $region8: #{tpu_custom_call.1} parent=1 // pred_region
      %s29 = ssub.s32 128, 128
      %30 = vsyncadd [#allocation6], %s29
      %s32 = sshll.u32 [#allocation5], 4
      %s33 = int_to_ptr.vmem [resolvable:$true] %s32
      %35 = dma.hbm_to_vmem [thread:$0]  %s1, 128, %s33, [#allocation6]
    $region9: #{tpu_custom_call.1} parent=1 // pred_fallthru
      _
    // Predicated region
    $region10: #{tpu_custom_call.1} parent=1 // pred_check
      _
    $region11: #{tpu_custom_call.1} parent=1 // pred_check_branch
      %37 = sbr.rel (0) target = $region13
    $region12: #{tpu_custom_call.1} parent=1 // pred_region
      %s39 = ssub.s32 128, 128
      %40 = vsyncadd [#allocation6], %s39
      %s42 = sshll.u32 [#allocation7], 4
      %s43 = int_to_ptr.vmem [resolvable:$true] %s42
      %45 = dma.hbm_to_vmem [thread:$0]  %s2, 128, %s43, [#allocation6]
    $region13: #{tpu_custom_call.1} parent=1 // pred_fallthru
      _
    // Predicated region
    $region14: #{tpu_custom_call.1} parent=1 // pred_check
      _
    $region15: #{tpu_custom_call.1} parent=1 // pred_check_branch
      %47 = sbr.rel (0) target = $region17
    $region16: #{tpu_custom_call.1} parent=1 // pred_region
      %s49 = ssub.s32 896, 896
      %50 = vsyncadd [#allocation9], %s49
      %s52 = sshll.u32 [#allocation8], 4
      %s53 = int_to_ptr.vmem [resolvable:$true] %s52
      %55 = dma.hbm_to_vmem [thread:$0]  %s3, 896, %s53, [#allocation9]
    $region17: #{tpu_custom_call.1} parent=1 // pred_fallthru
      _
    // Predicated region
    $region18: #{tpu_custom_call.1} parent=1 // pred_check
      _
    $region19: #{tpu_custom_call.1} parent=1 // pred_check_branch
      %57 = sbr.rel (0) target = $region21
    $region20: #{tpu_custom_call.1} parent=1 // pred_region
      %58 = dma.done [#allocation3], 128
    $region21: #{tpu_custom_call.1} parent=1 // pred_fallthru
      _
    // Predicated region
    $region22: #{tpu_custom_call.1} parent=1 // pred_check
      _
    $region23: #{tpu_custom_call.1} parent=1 // pred_check_branch
      %60 = sbr.rel (0) target = $region25
    $region24: #{tpu_custom_call.1} parent=1 // pred_region
      %61 = dma.done [#allocation6], 128
    $region25: #{tpu_custom_call.1} parent=1 // pred_fallthru
      _
    // Predicated region
    $region26: #{tpu_custom_call.1} parent=1 // pred_check
      _
    $region27: #{tpu_custom_call.1} parent=1 // pred_check_branch
      %63 = sbr.rel (0) target = $region29
    $region28: #{tpu_custom_call.1} parent=1 // pred_region
      %64 = dma.done [#allocation6], 128
    $region29: #{tpu_custom_call.1} parent=1 // pred_fallthru
      _
    // Predicated region
    $region30: #{tpu_custom_call.1} parent=1 // pred_check
      _
    $region31: #{tpu_custom_call.1} parent=1 // pred_check_branch
      %66 = sbr.rel (0) target = $region33
    $region32: #{tpu_custom_call.1} parent=1 // pred_region
      %67 = dma.done [#allocation9], 896
    $region33: #{tpu_custom_call.1} parent=1 // pred_fallthru
      _
    %v68 = vld [vmem:[#allocation2] sm:$0xff]
    %v69 = vld [vmem:[#allocation8] sm:$0xff]
    %v70 = vld [vmem:[#allocation8 + $0x8] sm:$0xff]
    %v71 = vld [vmem:[#allocation8 + $0x10] sm:$0xff]
    %v72 = vld [vmem:[#allocation8 + $0x18] sm:$0xff]
    %v73 = vld [vmem:[#allocation8 + $0x20] sm:$0xff]
    %v74 = vld [vmem:[#allocation8 + $0x28] sm:$0xff]
    %v75 = vld [vmem:[#allocation8 + $0x30] sm:$0xff]
    %v76 = vld [vmem:[#allocation5] sm:$0xff]
    %v78 = vlaneseq
    %v79 = vshrl.u32 %v78, 7
    %v80 = vsub.s32 0, %v79
    %v81 = vrot.slane %v76, %v80
    %v82 = vlaneseq
    %v83 = vshrl.u32 %v82, 7
    %v84 = vsub.s32 1, %v83
    %v85 = vrot.slane %v76, %v84
    %v86 = vlaneseq
    %v87 = vshrl.u32 %v86, 7
    %v88 = vsub.s32 2, %v87
    %v89 = vrot.slane %v76, %v88
    %v90 = vlaneseq
    %v91 = vshrl.u32 %v90, 7
    %v92 = vsub.s32 3, %v91
    %v93 = vrot.slane %v76, %v92
    %v94 = vlaneseq
    %v95 = vshrl.u32 %v94, 7
    %v96 = vsub.s32 4, %v95
    %v97 = vrot.slane %v76, %v96
    %v98 = vlaneseq
    %v99 = vshrl.u32 %v98, 7
    %v100 = vsub.s32 5, %v99
    %v101 = vrot.slane %v76, %v100
    %v102 = vlaneseq
    %v103 = vshrl.u32 %v102, 7
    %v104 = vsub.s32 6, %v103
    %v105 = vrot.slane %v76, %v104
    %v106 = vlaneseq
    %v107 = vshrl.u32 %v106, 7
    %v108 = vsub.s32 7, %v107
    %v109 = vrot.slane %v76, %v108
    %v118 = vld [vmem:[#allocation7] sm:$0xff]
    %v120 = vlaneseq
    %v121 = vshrl.u32 %v120, 7
    %v122 = vsub.s32 0, %v121
    %v123 = vrot.slane %v118, %v122
    %v124 = vlaneseq
    %v125 = vshrl.u32 %v124, 7
    %v126 = vsub.s32 1, %v125
    %v127 = vrot.slane %v118, %v126
    %v128 = vlaneseq
    %v129 = vshrl.u32 %v128, 7
    %v130 = vsub.s32 2, %v129
    %v131 = vrot.slane %v118, %v130
    %v132 = vlaneseq
    %v133 = vshrl.u32 %v132, 7
    %v134 = vsub.s32 3, %v133
    %v135 = vrot.slane %v118, %v134
    %v136 = vlaneseq
    %v137 = vshrl.u32 %v136, 7
    %v138 = vsub.s32 4, %v137
    %v139 = vrot.slane %v118, %v138
    %v140 = vlaneseq
    %v141 = vshrl.u32 %v140, 7
    %v142 = vsub.s32 5, %v141
    %v143 = vrot.slane %v118, %v142
    %v144 = vlaneseq
    %v145 = vshrl.u32 %v144, 7
    %v146 = vsub.s32 6, %v145
    %v147 = vrot.slane %v118, %v146
    %v148 = vlaneseq
    %v149 = vshrl.u32 %v148, 7
    %v150 = vsub.s32 7, %v149
    %v151 = vrot.slane %v118, %v150
    %160 = vst [vmem:[#allocation10] sm:$0xff] %v68
    %161 = vst [vmem:[#allocation10 + $0x8] sm:$0xff] %v81
    %162 = vst [vmem:[#allocation10 + $0x10] sm:$0xff] %v85
    %163 = vst [vmem:[#allocation10 + $0x18] sm:$0xff] %v89
    %164 = vst [vmem:[#allocation10 + $0x20] sm:$0xff] %v93
    %165 = vst [vmem:[#allocation10 + $0x28] sm:$0xff] %v97
    %166 = vst [vmem:[#allocation10 + $0x30] sm:$0xff] %v101
    %167 = vst [vmem:[#allocation10 + $0x38] sm:$0xff] %v105
    %168 = vst [vmem:[#allocation10 + $0x40] sm:$0xff] %v109
    %169 = vst [vmem:[#allocation10 + $0x48] sm:$0xff] %v69
    %170 = vst [vmem:[#allocation10 + $0x50] sm:$0xff] %v70
    %171 = vst [vmem:[#allocation10 + $0x58] sm:$0xff] %v71
    %172 = vst [vmem:[#allocation10 + $0x60] sm:$0xff] %v72
    %173 = vst [vmem:[#allocation10 + $0x68] sm:$0xff] %v73
    %174 = vst [vmem:[#allocation10 + $0x70] sm:$0xff] %v74
    %175 = vst [vmem:[#allocation10 + $0x78] sm:$0xff] %v75
    %176 = vst [vmem:[#allocation11] sm:$0xff] %v68
    %177 = vst [vmem:[#allocation11 + $0x8] sm:$0xff] %v123
    %178 = vst [vmem:[#allocation11 + $0x10] sm:$0xff] %v127
    %179 = vst [vmem:[#allocation11 + $0x18] sm:$0xff] %v131
    %180 = vst [vmem:[#allocation11 + $0x20] sm:$0xff] %v135
    %181 = vst [vmem:[#allocation11 + $0x28] sm:$0xff] %v139
    %182 = vst [vmem:[#allocation11 + $0x30] sm:$0xff] %v143
    %183 = vst [vmem:[#allocation11 + $0x38] sm:$0xff] %v147
    %184 = vst [vmem:[#allocation11 + $0x40] sm:$0xff] %v151
    %185 = vst [vmem:[#allocation11 + $0x48] sm:$0xff] %v69
    %186 = vst [vmem:[#allocation11 + $0x50] sm:$0xff] %v70
    %187 = vst [vmem:[#allocation11 + $0x58] sm:$0xff] %v71
    %188 = vst [vmem:[#allocation11 + $0x60] sm:$0xff] %v72
    %189 = vst [vmem:[#allocation11 + $0x68] sm:$0xff] %v73
    %190 = vst [vmem:[#allocation11 + $0x70] sm:$0xff] %v74
    %191 = vst [vmem:[#allocation11 + $0x78] sm:$0xff] %v75
    // Predicated region
    $region34: #{tpu_custom_call.1} parent=1 // pred_check
      _
    $region35: #{tpu_custom_call.1} parent=1 // pred_check_branch
      %193 = sbr.rel (0) target = $region37
    $region36: #{tpu_custom_call.1} parent=1 // pred_region
      %s195 = ssub.s32 2048, 2048
      %196 = vsyncadd [#allocation4], %s195
      %s198 = sshll.u32 [#allocation10], 4
      %s199 = int_to_ptr.vmem [resolvable:$true] %s198
      %201 = dma.vmem_to_hbm [thread:$0]  %s199, 2048, %s4, [#allocation4]
    $region37: #{tpu_custom_call.1} parent=1 // pred_fallthru
      _
    // Predicated region
    $region38: #{tpu_custom_call.1} parent=1 // pred_check
      _
    $region39: #{tpu_custom_call.1} parent=1 // pred_check_branch
      %203 = sbr.rel (0) target = $region41
    $region40: #{tpu_custom_call.1} parent=1 // pred_region
      %s205 = ssub.s32 2048, 2048
      %206 = vsyncadd [#allocation12], %s205
      %s208 = sshll.u32 [#allocation11], 4
      %s209 = int_to_ptr.vmem [resolvable:$true] %s208
      %211 = dma.vmem_to_hbm [thread:$0]  %s209, 2048, %s5, [#allocation12]
    $region41: #{tpu_custom_call.1} parent=1 // pred_fallthru
      _
    // Predicated region
    $region42: #{tpu_custom_call.1} parent=1 // pred_check
      _
    $region43: #{tpu_custom_call.1} parent=1 // pred_check_branch
      %213 = sbr.rel (0) target = $region45
    $region44: #{tpu_custom_call.1} parent=1 // pred_region
      %214 = dma.done [#allocation4], 2048
    $region45: #{tpu_custom_call.1} parent=1 // pred_fallthru
      _
    // Predicated region
    $region46: #{tpu_custom_call.1} parent=1 // pred_check
      _
    $region47: #{tpu_custom_call.1} parent=1 // pred_check_branch
      %216 = sbr.rel (0) target = $region49
    $region48: #{tpu_custom_call.1} parent=1 // pred_region
      %217 = dma.done [#allocation12], 2048
    $region49: #{tpu_custom_call.1} parent=1 // pred_fallthru
      _
    %218 = vsyncpa [#allocation3], 1
    %219 = vsyncpa [#allocation6], 1
    %220 = vsyncpa [#allocation9], 1
    %221 = vsyncpa [#allocation4], 1
    %222 = vsyncpa [#allocation12], 1

</llo_original>
